<compile_context>
chip_gen: v7x
topology: tpu7x:2x2x1
jax: 0.10.0
libtpu: 0.0.40
codegen_flags: <defaults>
</compile_context>

<pallas_src>
import jax
import jax.numpy as jnp
from jax.experimental import pallas as pl
from jax.experimental.pallas import tpu as pltpu


def _iaff_kernel(topic_ref, sent_ref, w1_ref, b1_ref, w2_ref, b2_ref, out_ref):
    # expanded_topic_vectors = topic_linear(topic_vectors)      (MXU, f32 acc)
    expanded = (
        jnp.dot(topic_ref[...], w1_ref[...], preferred_element_type=jnp.float32)
        + b1_ref[...]
    )

    # weights = sigmoid(expanded)                                (EUP)
    weights = jax.nn.sigmoid(expanded)

    # output_vectors = expanded * w + sentence * (1 - w)
    #                = sentence + w * (expanded - sentence)      (one fewer vmul)
    sent = sent_ref[...].astype(jnp.float32)
    fused = sent + weights * (expanded - sent)

    # final_linear(output_vectors)                               (MXU, f32 acc)
    out = (
        jnp.dot(fused, w2_ref[...], preferred_element_type=jnp.float32)
        + b2_ref[...]
    )
    out_ref[...] = out.astype(out_ref.dtype)


def iaff_forward(topic, sentence, w1, b1, w2, b2, *, tb=None):
    """topic: [B, Dt], sentence: [B, Ds], w1: [Dt, Ds], b1: [Ds] or [1, Ds],
    w2: [Ds, Dout], b2: [Dout] or [1, Dout] -> [B, Dout] (float32)."""
    B, Dt = topic.shape
    Ds = sentence.shape[1]
    Dout = w2.shape[1]

    b1 = jnp.reshape(b1, (1, Ds))
    b2 = jnp.reshape(b2, (1, Dout))

    # Batch tile: big tiles for HBM roofline, but keep >= 2 grid steps when
    # B > 8 so v7x's 2 TensorCores both get work ("parallel" grid axis).
    if tb is None:
        half = ((pl.cdiv(B, 2) + 7) // 8) * 8
        tb = min(1024, max(8, half))
    tb = ((tb + 7) // 8) * 8                 # sublane-aligned tile
    B_pad = pl.cdiv(B, tb) * tb              # ragged-batch pad

    if B_pad != B:
        pad = B_pad - B
        topic = jnp.pad(topic, ((0, pad), (0, 0)))
        sentence = jnp.pad(sentence, ((0, pad), (0, 0)))

    grid = (B_pad // tb,)

    out = pl.pallas_call(
        _iaff_kernel,
        out_shape=jax.ShapeDtypeStruct((B_pad, Dout), jnp.float32),
        grid=grid,
        in_specs=[
            pl.BlockSpec((tb, Dt), lambda i: (i, 0)),      # topic tile
            pl.BlockSpec((tb, Ds), lambda i: (i, 0)),      # sentence tile
            pl.BlockSpec((Dt, Ds), lambda i: (0, 0)),      # w1 (resident)
            pl.BlockSpec((1, Ds), lambda i: (0, 0)),       # b1
            pl.BlockSpec((Ds, Dout), lambda i: (0, 0)),    # w2 (resident)
            pl.BlockSpec((1, Dout), lambda i: (0, 0)),     # b2
        ],
        out_specs=pl.BlockSpec((tb, Dout), lambda i: (i, 0)),
        compiler_params=pltpu.CompilerParams(
            dimension_semantics=("parallel",)
        ),
    )(topic, sentence, w1, b1, w2, b2)

    return out[:B] if B_pad != B else out


def iaff_reference(topic, sentence, w1, b1, w2, b2):
    expanded = topic @ w1 + jnp.reshape(b1, (1, -1))
    weights = jax.nn.sigmoid(expanded)
    fused = expanded * weights + sentence * (1.0 - weights)
    return fused @ w2 + jnp.reshape(b2, (1, -1))


if __name__ == "__main__":
    B = 16            # batch
    topic_dim = 32
    sentence_dim = 64
    out_dim = 2       # final_linear output

    key = jax.random.PRNGKey(0)
    k_topic, k_sent, k_w1, k_b1, k_w2, k_b2 = jax.random.split(key, 6)

    topic = jax.random.normal(k_topic, (B, topic_dim), dtype=jnp.float32)
    sentence = jax.random.normal(k_sent, (B, sentence_dim), dtype=jnp.float32)

    # Deterministic parameter init (PyTorch Linear shapes, stored transposed).
    w1 = jax.random.normal(k_w1, (topic_dim, sentence_dim), dtype=jnp.float32) * 0.1
    b1 = jax.random.normal(k_b1, (1, sentence_dim), dtype=jnp.float32) * 0.1
    w2 = jax.random.normal(k_w2, (sentence_dim, out_dim), dtype=jnp.float32) * 0.1
    b2 = jax.random.normal(k_b2, (1, out_dim), dtype=jnp.float32) * 0.1

    out = iaff_forward(topic, sentence, w1, b1, w2, b2)
    out = jax.block_until_ready(out)

    ref = iaff_reference(topic, sentence, w1, b1, w2, b2)
    assert out.shape == (B, out_dim)
    assert jnp.allclose(out, ref, atol=1e-5, rtol=1e-5), "mismatch vs reference"

    print("KERNEL_OK")
</pallas_src>

<mosaic_0001>
module attributes {stable_mosaic.version = 11 : i64} {
  func.func @_iaff_kernel(%arg0: i32, %arg1: memref<8x32xf32, #tpu.memory_space<vmem>>, %arg2: memref<8x64xf32, #tpu.memory_space<vmem>>, %arg3: memref<32x64xf32, #tpu.memory_space<vmem>>, %arg4: memref<1x64xf32, #tpu.memory_space<vmem>>, %arg5: memref<64x2xf32, #tpu.memory_space<vmem>>, %arg6: memref<1x2xf32, #tpu.memory_space<vmem>>, %arg7: memref<8x2xf32, #tpu.memory_space<vmem>>) attributes {dimension_semantics = [#tpu.dimension_semantics<parallel>], iteration_bounds = array<i64: 2>, scalar_prefetch = 0 : i64, scratch_operands = 0 : i64, tpu.core_type = #tpu.core_type<tc>, window_params = [{transform_indices = @transform_0, window_bounds = array<i64: 8, 32>}, {transform_indices = @transform_1, window_bounds = array<i64: 8, 64>}, {pipeline_mode = #tpu.pipeline_mode<synchronous>, transform_indices = @transform_2, window_bounds = array<i64: 32, 64>}, {pipeline_mode = #tpu.pipeline_mode<synchronous>, transform_indices = @transform_3, window_bounds = array<i64: 1, 64>}, {pipeline_mode = #tpu.pipeline_mode<synchronous>, transform_indices = @transform_4, window_bounds = array<i64: 64, 2>}, {pipeline_mode = #tpu.pipeline_mode<synchronous>, transform_indices = @transform_5, window_bounds = array<i64: 1, 2>}, {transform_indices = @transform_6, window_bounds = array<i64: 8, 2>}]} {
    %c0 = arith.constant 0 : index
    %c0_0 = arith.constant 0 : index
    %0 = vector.load %arg1[%c0, %c0_0] : memref<8x32xf32, #tpu.memory_space<vmem>>, vector<8x32xf32>
    %c0_1 = arith.constant 0 : index
    %c0_2 = arith.constant 0 : index
    %1 = vector.load %arg3[%c0_1, %c0_2] : memref<32x64xf32, #tpu.memory_space<vmem>>, vector<32x64xf32>
    %cst = arith.constant dense<0.000000e+00> : vector<8x64xf32>
    %2 = tpu.matmul %0, %1, %cst {dimension_numbers = #tpu.dot_dimension_numbers<[1], [0], [0], [1], [0, 0, 1, 1], [], []>} : vector<8x32xf32>, vector<32x64xf32>, vector<8x64xf32> -> vector<8x64xf32>
    %c0_3 = arith.constant 0 : index
    %c0_4 = arith.constant 0 : index
    %3 = vector.load %arg4[%c0_3, %c0_4] : memref<1x64xf32, #tpu.memory_space<vmem>>, vector<1x64xf32>
    %4 = vector.broadcast %3 : vector<1x64xf32> to vector<8x64xf32>
    %5 = arith.addf %2, %4 : vector<8x64xf32>
    %6 = arith.negf %5 : vector<8x64xf32>
    %7 = math.exp %6 : vector<8x64xf32>
    %cst_5 = arith.constant 1.000000e+00 : f32
    %8 = vector.broadcast %cst_5 : f32 to vector<8x64xf32>
    %9 = arith.addf %8, %7 : vector<8x64xf32>
    %10 = arith.divf %8, %9 : vector<8x64xf32>
    %c0_6 = arith.constant 0 : index
    %c0_7 = arith.constant 0 : index
    %11 = vector.load %arg2[%c0_6, %c0_7] : memref<8x64xf32, #tpu.memory_space<vmem>>, vector<8x64xf32>
    %12 = arith.subf %5, %11 : vector<8x64xf32>
    %13 = arith.mulf %10, %12 : vector<8x64xf32>
    %14 = arith.addf %11, %13 : vector<8x64xf32>
    %c0_8 = arith.constant 0 : index
    %c0_9 = arith.constant 0 : index
    %15 = vector.load %arg5[%c0_8, %c0_9] : memref<64x2xf32, #tpu.memory_space<vmem>>, vector<64x2xf32>
    %cst_10 = arith.constant dense<0.000000e+00> : vector<8x2xf32>
    %16 = tpu.matmul %14, %15, %cst_10 {dimension_numbers = #tpu.dot_dimension_numbers<[1], [0], [0], [1], [0, 0, 1, 1], [], []>} : vector<8x64xf32>, vector<64x2xf32>, vector<8x2xf32> -> vector<8x2xf32>
    %c0_11 = arith.constant 0 : index
    %c0_12 = arith.constant 0 : index
    %17 = vector.load %arg6[%c0_11, %c0_12] : memref<1x2xf32, #tpu.memory_space<vmem>>, vector<1x2xf32>
    %18 = vector.broadcast %17 : vector<1x2xf32> to vector<8x2xf32>
    %19 = arith.addf %16, %18 : vector<8x2xf32>
    %c0_13 = arith.constant 0 : index
    %c0_14 = arith.constant 0 : index
    %20 = vector.load %arg7[%c0_13, %c0_14] : memref<8x2xf32, #tpu.memory_space<vmem>>, vector<8x2xf32>
    tpu.vector_store %arg7[%c0_13, %c0_14], %19 {strides = array<i32>} : memref<8x2xf32, #tpu.memory_space<vmem>>, vector<8x2xf32>,
    return
  }
  func.func @transform_0(%arg0: i32) -> (i32, i32) {
    %c0_i32 = arith.constant 0 : i32
    %c0_i32_0 = arith.constant 0 : i32
    return %arg0, %c0_i32 : i32, i32
  }
  func.func @transform_1(%arg0: i32) -> (i32, i32) {
    %c0_i32 = arith.constant 0 : i32
    %c0_i32_0 = arith.constant 0 : i32
    return %arg0, %c0_i32 : i32, i32
  }
  func.func @transform_2(%arg0: i32) -> (i32, i32) {
    %c0_i32 = arith.constant 0 : i32
    %c0_i32_0 = arith.constant 0 : i32
    %c0_i32_1 = arith.constant 0 : i32
    return %c0_i32, %c0_i32_0 : i32, i32
  }
  func.func @transform_3(%arg0: i32) -> (i32, i32) {
    %c0_i32 = arith.constant 0 : i32
    %c0_i32_0 = arith.constant 0 : i32
    %c0_i32_1 = arith.constant 0 : i32
    return %c0_i32, %c0_i32_0 : i32, i32
  }
  func.func @transform_4(%arg0: i32) -> (i32, i32) {
    %c0_i32 = arith.constant 0 : i32
    %c0_i32_0 = arith.constant 0 : i32
    %c0_i32_1 = arith.constant 0 : i32
    return %c0_i32, %c0_i32_0 : i32, i32
  }
  func.func @transform_5(%arg0: i32) -> (i32, i32) {
    %c0_i32 = arith.constant 0 : i32
    %c0_i32_0 = arith.constant 0 : i32
    %c0_i32_1 = arith.constant 0 : i32
    return %c0_i32, %c0_i32_0 : i32, i32
  }
  func.func @transform_6(%arg0: i32) -> (i32, i32) {
    %c0_i32 = arith.constant 0 : i32
    %c0_i32_0 = arith.constant 0 : i32
    return %arg0, %c0_i32 : i32, i32
  }
}

</mosaic_0001>

<llo_original>
// kernel: tpu_custom_call.1
$region0: #{tpu_custom_call.1}
  #allocation0 [shape = 'u32[]', space=smem, size = 0x4, offset = 0x4, fixed_abs, tag = 'smem constant byte address 0x4 - core index']
  #allocation1 [shape = 'u32[144,128]{1,0:T(1,128)}', space=vmem, size = 0x12000, scoped, tag = 'internal scratch']
  %s0 = inlined_call_operand.vmem [shape: f32[16,32], index: 0, kind: input, shape index: {}]
  %s1 = inlined_call_operand.vmem [shape: f32[16,64], index: 1, kind: input, shape index: {}]
  %s2 = inlined_call_operand.vmem [shape: f32[32,64], index: 2, kind: input, shape index: {}]
  %s3 = inlined_call_operand.vmem [shape: f32[1,64], index: 3, kind: input, shape index: {}]
  %s4 = inlined_call_operand.vmem [shape: f32[64,2], index: 4, kind: input, shape index: {}]
  %s5 = inlined_call_operand.vmem [shape: f32[1,2], index: 5, kind: input, shape index: {}]
  %s6 = inlined_call_operand.vmem [shape: f32[16,2], index: 6, kind: output, shape index: {}]
  %s7 = sld [smem:[#allocation0]]
  $region57: #{tpu_custom_call.1} parent=0
    _
  %s9 = ssub.s32 1, %s7
  %s10 = scalar_select 0, %s9, %s7
  loop: start=0, step=1, limit=4
  $region2: #{tpu_custom_call.1} parent=0 // loop_pre_header
    _
  $region3: #{tpu_custom_call.1} parent=0 // loop_header
    %s12 = sphi 0, %s16
    %p13 = scmp.ge.s32.totalorder %s12, 4
    %s22 = sphi 0, %s24
    %s25 = sphi 0, %s22
    %s26 = sphi 0, %s25
    %s42 = sphi 0, %s26
    %s48 = sphi 0, %s50
    %s51 = sphi 0, %s48
    %s52 = sphi 0, %s51
    %s68 = sphi 0, %s52
    %s72 = sphi 0, %s72
    %s74 = sphi 0, %s72
    %s75 = sphi 0, %s74
    %s89 = sphi 0, %s75
    %s93 = sphi 0, %s93
    %s95 = sphi 0, %s93
    %s96 = sphi 0, %s95
    %s110 = sphi 0, %s96
    %s114 = sphi 0, %s114
    %s116 = sphi 0, %s114
    %s117 = sphi 0, %s116
    %s131 = sphi 0, %s117
    %s135 = sphi 0, %s135
    %s137 = sphi 0, %s135
    %s138 = sphi 0, %s137
    %s152 = sphi 0, %s138
    %s158 = sphi 0, %s160
    %s161 = sphi 0, %s158
    %s162 = sphi 0, %s161
    %s178 = sphi 0, %s162
  $region4: #{tpu_custom_call.1} parent=0 // loop_header_branch
    %15 = sbr.rel (%p13) target = $region8
  $region5: #{tpu_custom_call.1} parent=0 // loop_body
    %s17 = ssub.s32 %s12, 1
    %s18 = ssub.s32 %s12, 2
    %s19 = sadd.s32 %s12, 1
    %s20 = ssub.s32 %s12, %s19
    %p21 = scmp.eq.s32.totalorder %s20, 0
    %s23 = sadd.s32 %s22, 1
    %s24 = scalar_select %p21, %s22, %s23
    %p27 = pneg %p21
    %p28 = scmp.eq.s32.totalorder %s12, 1
    %p29 = por %p27, %p28
    %p30 = scmp.ne.s32.totalorder %s22, %s25
    %p31 = scmp.eq.s32.totalorder %s12, 0
    %p32 = por %p30, %p31
    %p33 = scmp.ne.s32.totalorder %s22, %s25
    %p34 = scmp.eq.s32.totalorder %s17, 1
    %p35 = por %p33, %p34
    %p36 = scmp.ne.s32.totalorder %s25, %s26
    %p37 = scmp.eq.s32.totalorder %s17, 0
    %p38 = por %p36, %p37
    %p39 = scmp.ne.s32.totalorder %s25, %s26
    %p40 = scmp.eq.s32.totalorder %s18, 1
    %p41 = por %p39, %p40
    %p43 = scmp.ne.s32.totalorder %s26, %s42
    %p44 = scmp.eq.s32.totalorder %s18, 0
    %p45 = por %p43, %p44
    %s46 = ssub.s32 %s12, %s19
    %p47 = scmp.eq.s32.totalorder %s46, 0
    %s49 = sadd.s32 %s48, 1
    %s50 = scalar_select %p47, %s48, %s49
    %p53 = pneg %p47
    %p54 = scmp.eq.s32.totalorder %s12, 1
    %p55 = por %p53, %p54
    %p56 = scmp.ne.s32.totalorder %s48, %s51
    %p57 = scmp.eq.s32.totalorder %s12, 0
    %p58 = por %p56, %p57
    %p59 = scmp.ne.s32.totalorder %s48, %s51
    %p60 = scmp.eq.s32.totalorder %s17, 1
    %p61 = por %p59, %p60
    %p62 = scmp.ne.s32.totalorder %s51, %s52
    %p63 = scmp.eq.s32.totalorder %s17, 0
    %p64 = por %p62, %p63
    %p65 = scmp.ne.s32.totalorder %s51, %s52
    %p66 = scmp.eq.s32.totalorder %s18, 1
    %p67 = por %p65, %p66
    %p69 = scmp.ne.s32.totalorder %s52, %s68
    %p70 = scmp.eq.s32.totalorder %s18, 0
    %p71 = por %p69, %p70
    %s73 = sadd.s32 %s72, 1
    %p76 = scmp.eq.s32.totalorder %s12, 1
    %p77 = scmp.ne.s32.totalorder %s72, %s74
    %p78 = scmp.eq.s32.totalorder %s12, 0
    %p79 = por %p77, %p78
    %p80 = scmp.ne.s32.totalorder %s72, %s74
    %p81 = scmp.eq.s32.totalorder %s17, 1
    %p82 = por %p80, %p81
    %p83 = scmp.ne.s32.totalorder %s74, %s75
    %p84 = scmp.eq.s32.totalorder %s17, 0
    %p85 = por %p83, %p84
    %p86 = scmp.ne.s32.totalorder %s74, %s75
    %p87 = scmp.eq.s32.totalorder %s18, 1
    %p88 = por %p86, %p87
    %p90 = scmp.ne.s32.totalorder %s75, %s89
    %p91 = scmp.eq.s32.totalorder %s18, 0
    %p92 = por %p90, %p91
    %s94 = sadd.s32 %s93, 1
    %p97 = scmp.eq.s32.totalorder %s12, 1
    %p98 = scmp.ne.s32.totalorder %s93, %s95
    %p99 = scmp.eq.s32.totalorder %s12, 0
    %p100 = por %p98, %p99
    %p101 = scmp.ne.s32.totalorder %s93, %s95
    %p102 = scmp.eq.s32.totalorder %s17, 1
    %p103 = por %p101, %p102
    %p104 = scmp.ne.s32.totalorder %s95, %s96
    %p105 = scmp.eq.s32.totalorder %s17, 0
    %p106 = por %p104, %p105
    %p107 = scmp.ne.s32.totalorder %s95, %s96
    %p108 = scmp.eq.s32.totalorder %s18, 1
    %p109 = por %p107, %p108
    %p111 = scmp.ne.s32.totalorder %s96, %s110
    %p112 = scmp.eq.s32.totalorder %s18, 0
    %p113 = por %p111, %p112
    %s115 = sadd.s32 %s114, 1
    %p118 = scmp.eq.s32.totalorder %s12, 1
    %p119 = scmp.ne.s32.totalorder %s114, %s116
    %p120 = scmp.eq.s32.totalorder %s12, 0
    %p121 = por %p119, %p120
    %p122 = scmp.ne.s32.totalorder %s114, %s116
    %p123 = scmp.eq.s32.totalorder %s17, 1
    %p124 = por %p122, %p123
    %p125 = scmp.ne.s32.totalorder %s116, %s117
    %p126 = scmp.eq.s32.totalorder %s17, 0
    %p127 = por %p125, %p126
    %p128 = scmp.ne.s32.totalorder %s116, %s117
    %p129 = scmp.eq.s32.totalorder %s18, 1
    %p130 = por %p128, %p129
    %p132 = scmp.ne.s32.totalorder %s117, %s131
    %p133 = scmp.eq.s32.totalorder %s18, 0
    %p134 = por %p132, %p133
    %s136 = sadd.s32 %s135, 1
    %p139 = scmp.eq.s32.totalorder %s12, 1
    %p140 = scmp.ne.s32.totalorder %s135, %s137
    %p141 = scmp.eq.s32.totalorder %s12, 0
    %p142 = por %p140, %p141
    %p143 = scmp.ne.s32.totalorder %s135, %s137
    %p144 = scmp.eq.s32.totalorder %s17, 1
    %p145 = por %p143, %p144
    %p146 = scmp.ne.s32.totalorder %s137, %s138
    %p147 = scmp.eq.s32.totalorder %s17, 0
    %p148 = por %p146, %p147
    %p149 = scmp.ne.s32.totalorder %s137, %s138
    %p150 = scmp.eq.s32.totalorder %s18, 1
    %p151 = por %p149, %p150
    %p153 = scmp.ne.s32.totalorder %s138, %s152
    %p154 = scmp.eq.s32.totalorder %s18, 0
    %p155 = por %p153, %p154
    %s156 = ssub.s32 %s12, %s19
    %p157 = scmp.eq.s32.totalorder %s156, 0
    %s159 = sadd.s32 %s158, 1
    %s160 = scalar_select %p157, %s158, %s159
    %p163 = pneg %p157
    %p164 = scmp.eq.s32.totalorder %s12, 1
    %p165 = por %p163, %p164
    %p166 = scmp.ne.s32.totalorder %s158, %s161
    %p167 = scmp.eq.s32.totalorder %s12, 0
    %p168 = por %p166, %p167
    %p169 = scmp.ne.s32.totalorder %s158, %s161
    %p170 = scmp.eq.s32.totalorder %s17, 1
    %p171 = por %p169, %p170
    %p172 = scmp.ne.s32.totalorder %s161, %s162
    %p173 = scmp.eq.s32.totalorder %s17, 0
    %p174 = por %p172, %p173
    %p175 = scmp.ne.s32.totalorder %s161, %s162
    %p176 = scmp.eq.s32.totalorder %s18, 1
    %p177 = por %p175, %p176
    %p179 = scmp.ne.s32.totalorder %s162, %s178
    %p180 = scmp.eq.s32.totalorder %s18, 0
    %p181 = por %p179, %p180
    %p182 = scmp.le.s32.totalorder 1, %s12
    %p183 = scmp.lt.s32.totalorder %s12, 3
    %p184 = pnand %p182, %p183
    %p185 = pneg %p184
    // Predicated region
    $region9: #{tpu_custom_call.1} parent=5 // pred_check
      _
    $region10: #{tpu_custom_call.1} parent=5 // pred_check_branch
      %187 = sbr.rel (%p184) target = $region12
    $region11: #{tpu_custom_call.1} parent=5 // pred_region
      %s188 = ssub.s32 %s12, 1
      // Predicated region
      $region13: #{tpu_custom_call.1} parent=11 // pred_check
        %p189 = pneg %p85
      $region14: #{tpu_custom_call.1} parent=11 // pred_check_branch
        %191 = sbr.rel (%p189) target = $region16
      $region15: #{tpu_custom_call.1} parent=11 // pred_region
        _
      $region16: #{tpu_custom_call.1} parent=11 // pred_fallthru
        _
      // Predicated region
      $region17: #{tpu_custom_call.1} parent=11 // pred_check
        %p192 = pneg %p106
      $region18: #{tpu_custom_call.1} parent=11 // pred_check_branch
        %194 = sbr.rel (%p192) target = $region20
      $region19: #{tpu_custom_call.1} parent=11 // pred_region
        _
      $region20: #{tpu_custom_call.1} parent=11 // pred_fallthru
        _
      // Predicated region
      $region21: #{tpu_custom_call.1} parent=11 // pred_check
        %p195 = pneg %p127
      $region22: #{tpu_custom_call.1} parent=11 // pred_check_branch
        %197 = sbr.rel (%p195) target = $region24
      $region23: #{tpu_custom_call.1} parent=11 // pred_region
        _
      $region24: #{tpu_custom_call.1} parent=11 // pred_fallthru
        _
      // Predicated region
      $region25: #{tpu_custom_call.1} parent=11 // pred_check
        %p198 = pneg %p148
      $region26: #{tpu_custom_call.1} parent=11 // pred_check_branch
        %200 = sbr.rel (%p198) target = $region28
      $region27: #{tpu_custom_call.1} parent=11 // pred_region
        _
      $region28: #{tpu_custom_call.1} parent=11 // pred_fallthru
        _
    $region12: #{tpu_custom_call.1} parent=5 // pred_fallthru
      _
    %p201 = scmp.lt.s32.totalorder %s12, 2
    // Predicated region
    $region29: #{tpu_custom_call.1} parent=5 // pred_check
      %p202 = pneg %p201
    $region30: #{tpu_custom_call.1} parent=5 // pred_check_branch
      %204 = sbr.rel (%p202) target = $region32
    $region31: #{tpu_custom_call.1} parent=5 // pred_region
      // Predicated region
      $region33: #{tpu_custom_call.1} parent=31 // pred_check
        %p205 = pneg %p32
      $region34: #{tpu_custom_call.1} parent=31 // pred_check_branch
        %207 = sbr.rel (%p205) target = $region36
      $region35: #{tpu_custom_call.1} parent=31 // pred_region
        %p208 = scmp.lt.s32.totalorder %s12, 1
        %s209 = scalar_select %p208, %s12, 1
        %s210 = smul.addr %s209, 8
        %s211 = scalar_lea.vmem %s0, %s210
      $region36: #{tpu_custom_call.1} parent=31 // pred_fallthru
        _
      // Predicated region
      $region37: #{tpu_custom_call.1} parent=31 // pred_check
        %p212 = pneg %p58
      $region38: #{tpu_custom_call.1} parent=31 // pred_check_branch
        %214 = sbr.rel (%p212) target = $region40
      $region39: #{tpu_custom_call.1} parent=31 // pred_region
        %p215 = scmp.lt.s32.totalorder %s12, 1
        %s216 = scalar_select %p215, %s12, 1
        %s217 = smul.addr %s216, 8
        %s218 = scalar_lea.vmem %s1, %s217
      $region40: #{tpu_custom_call.1} parent=31 // pred_fallthru
        _
    $region32: #{tpu_custom_call.1} parent=5 // pred_fallthru
      _
    %p219 = scmp.le.s32.totalorder 1, %s12
    %p220 = scmp.lt.s32.totalorder %s12, 3
    %p221 = pnand %p219, %p220
    %p222 = pneg %p221
    // Predicated region
    $region41: #{tpu_custom_call.1} parent=5 // pred_check
      _
    $region42: #{tpu_custom_call.1} parent=5 // pred_check_branch
      %224 = sbr.rel (%p221) target = $region44
    $region43: #{tpu_custom_call.1} parent=5 // pred_region
      %s225 = ssub.s32 %s12, 1
      %p226 = scmp.lt.s32.totalorder %s17, 1
      %s227 = scalar_select %p226, %s17, 1
      %s228 = smul.addr %s227, 8
      %s229 = scalar_lea.vmem %s0, %s228
      %p230 = pneg %p38
      %p231 = pneg %p35
      %p232 = scmp.lt.s32.totalorder %s17, 1
      %s233 = scalar_select %p232, %s17, 1
      %s234 = smul.addr %s233, 8
      %s235 = scalar_lea.vmem %s1, %s234
      %p236 = pneg %p64
      %p237 = pneg %p61
      %p238 = pneg %p85
      %p239 = pneg %p82
      %p240 = pneg %p106
      %p241 = pneg %p103
      %p242 = pneg %p127
      %p243 = pneg %p124
      %p244 = pneg %p148
      %p245 = pneg %p145
      %p246 = pneg %p174
      %p247 = pneg %p171
      %p248 = scmp.lt.s32.totalorder %s17, 1
      %s249 = scalar_select %p248, %s17, 1
      %s250 = smul.addr %s249, 8
      %s251 = scalar_lea.vmem %s6, %s250
      %p252 = scmp.lt.s32.totalorder %s17, 1
      %s253 = scalar_select %p252, %s17, 1
      %s254 = smul.addr %s253, 8
      %s255 = scalar_lea.vmem %s0, %s254
      %p256 = scmp.lt.s32.totalorder %s17, 1
      %s257 = scalar_select %p256, %s17, 1
      %s258 = smul.addr %s257, 8
      %s259 = scalar_lea.vmem %s1, %s258
      %p260 = scmp.lt.s32.totalorder %s17, 1
      %s261 = scalar_select %p260, %s17, 1
      %s262 = smul.addr %s261, 8
      %s263 = scalar_lea.vmem %s6, %s262
      %v264 = vld [vmem:[%s255] sm:$0xff]
      %v265 = vld [vmem:[%s2] sm:$0xff]
      %v266 = vld [vmem:[%s2 + $0x8] sm:$0xff]
      %v267 = vld [vmem:[%s2 + $0x10] sm:$0xff]
      %v268 = vld [vmem:[%s2 + $0x18] sm:$0xff]
      %v269 = vld [vmem:[%s3] sm:$0x1]
      %v271 = vlaneseq
      %v272 = vshrl.u32 %v271, 7
      %v273 = vsub.s32 0, %v272
      %v274 = vrot.slane %v269, %v273
      %vm276 = vcmask 261120
      %v278 = vsel %vm276, %v264, 0
      %280 = vmatprep.subr.mxu0 0.0
      %281 = vmatpush1.msra.mxu0 %v265
      %282 = vmatprep.subr.mxu0 0.0
      %283 = vmatpush1.msra.mxu0 %v266
      %284 = vmatprep.subr.mxu0 0.0
      %285 = vmatpush1.msra.mxu0 %v267
      %286 = vmatprep.subr.mxu0 0.0
      %287 = vmatpush1.msra.mxu0 %v268
      %288 = vmatprep.subr.mxu0 0.0
      %289 = vmatpush1.msra.mxu0 0.0
      %290 = vmatprep.subr.mxu0 0.0
      %291 = vmatpush1.msra.mxu0 0.0
      %292 = vmatprep.subr.mxu0 0.0
      %293 = vmatpush1.msra.mxu0 0.0
      %294 = vmatprep.subr.mxu0 0.0
      %295 = vmatpush1.msra.mxu0 0.0
      %296 = vmatprep.subr.mxu0 0.0
      %297 = vmatpush1.msra.mxu0 0.0
      %298 = vmatprep.subr.mxu0 0.0
      %299 = vmatpush1.msra.mxu0 0.0
      %300 = vmatprep.subr.mxu0 0.0
      %301 = vmatpush1.msra.mxu0 0.0
      %302 = vmatprep.subr.mxu0 0.0
      %303 = vmatpush1.msra.mxu0 0.0
      %304 = vmatprep.subr.mxu0 0.0
      %305 = vmatpush1.msra.mxu0 0.0
      %306 = vmatprep.subr.mxu0 0.0
      %307 = vmatpush1.msra.mxu0 0.0
      %308 = vmatprep.subr.mxu0 0.0
      %309 = vmatpush1.msra.mxu0 0.0
      %310 = vmatprep.subr.mxu0 0.0
      %311 = vmatpush1.msra.mxu0 0.0
      %312 = vmatprep.subr.mxu0 0.0
      %313 = vmatpush1.msra.mxu0 0.0
      %314 = vmatprep.subr.mxu0 0.0
      %315 = vmatpush1.msra.mxu0 0.0
      %316 = vmatprep.subr.mxu0 0.0
      %317 = vmatpush1.msra.mxu0 0.0
      %318 = vmatprep.subr.mxu0 0.0
      %319 = vmatpush1.msra.mxu0 0.0
      %320 = vmatprep.subr.mxu0 0.0
      %321 = vmatpush1.msra.mxu0 0.0
      %322 = vmatprep.subr.mxu0 0.0
      %323 = vmatpush1.msra.mxu0 0.0
      %324 = vmatprep.subr.mxu0 0.0
      %325 = vmatpush1.msra.mxu0 0.0
      %326 = vmatprep.subr.mxu0 0.0
      %327 = vmatpush1.msra.mxu0 0.0
      %328 = vmatprep.subr.mxu0 0.0
      %329 = vmatpush1.msra.mxu0 0.0
      %330 = vmatprep.subr.mxu0 0.0
      %331 = vmatpush1.msra.mxu0 0.0
      %332 = vmatprep.subr.mxu0 0.0
      %333 = vmatpush1.msra.mxu0 0.0
      %334 = vmatprep.subr.mxu0 0.0
      %335 = vmatpush1.msra.mxu0 0.0
      %336 = vmatprep.subr.mxu0 0.0
      %337 = vmatpush1.msra.mxu0 0.0
      %338 = vmatprep.subr.mxu0 0.0
      %339 = vmatpush1.msra.mxu0 0.0
      %340 = vmatprep.subr.mxu0 0.0
      %341 = vmatpush1.msra.mxu0 0.0
      %342 = vmatprep.subr.mxu0 0.0
      %343 = vmatpush1.msra.mxu0 0.0
      %344 = vmatprep.mubr.f32.mxu0 0.0
      %345 = vmatmul.mubr.f32.gmra.mrb[0].mxu0 %v278
      %v346 = vpop.f32.mrb[0].mxu0
      %v347 = vadd.f32 %v274, %v346
      %v348 = vpop.f32.mrb[0].mxu0
      %349 = vdwg.mxu0
      %v350 = vxor.u32 %v347, 2147483648
      %v351 = vmul.f32 %v350, 1.442695
      %v352 = vpow.pop %v351
      %v353 = vadd.f32 %v352, 1.0
      %v354 = vrcp.pop %v353
      %v355 = vmul.f32 1.0, %v354
      %v356 = vld [vmem:[%s259] sm:$0xff]
      %v357 = vsub.f32 %v347, %v356
      %v358 = vmul.f32 %v355, %v357
      %v359 = vadd.f32 %v356, %v358
      %v360 = vld [vmem:[%s4] sm:$0xff]
      %v361 = vld [vmem:[%s4 + $0x8] sm:$0xff]
      %v362 = vld [vmem:[%s4 + $0x10] sm:$0xff]
      %v363 = vld [vmem:[%s4 + $0x18] sm:$0xff]
      %v364 = vld [vmem:[%s4 + $0x20] sm:$0xff]
      %v365 = vld [vmem:[%s4 + $0x28] sm:$0xff]
      %v366 = vld [vmem:[%s4 + $0x30] sm:$0xff]
      %v367 = vld [vmem:[%s4 + $0x38] sm:$0xff]
      %v368 = vld [vmem:[%s5] sm:$0x1]
      %v370 = vlaneseq
      %v371 = vshrl.u32 %v370, 7
      %v372 = vsub.s32 0, %v371
      %v373 = vrot.slane %v368, %v372
      %vm375 = vcmask 523264
      %v377 = vsel %vm375, %v359, 0
      %379 = vmatprep.subr.mxu0 0.0
      %380 = vmatpush1.msra.mxu0 %v360
      %381 = vmatprep.subr.mxu0 0.0
      %382 = vmatpush1.msra.mxu0 %v361
      %383 = vmatprep.subr.mxu0 0.0
      %384 = vmatpush1.msra.mxu0 %v362
      %385 = vmatprep.subr.mxu0 0.0
      %386 = vmatpush1.msra.mxu0 %v363
      %387 = vmatprep.subr.mxu0 0.0
      %388 = vmatpush1.msra.mxu0 %v364
      %389 = vmatprep.subr.mxu0 0.0
      %390 = vmatpush1.msra.mxu0 %v365
      %391 = vmatprep.subr.mxu0 0.0
      %392 = vmatpush1.msra.mxu0 %v366
      %393 = vmatprep.subr.mxu0 0.0
      %394 = vmatpush1.msra.mxu0 %v367
      %395 = vmatprep.subr.mxu0 0.0
      %396 = vmatpush1.msra.mxu0 0.0
      %397 = vmatprep.subr.mxu0 0.0
      %398 = vmatpush1.msra.mxu0 0.0
      %399 = vmatprep.subr.mxu0 0.0
      %400 = vmatpush1.msra.mxu0 0.0
      %401 = vmatprep.subr.mxu0 0.0
      %402 = vmatpush1.msra.mxu0 0.0
      %403 = vmatprep.subr.mxu0 0.0
      %404 = vmatpush1.msra.mxu0 0.0
      %405 = vmatprep.subr.mxu0 0.0
      %406 = vmatpush1.msra.mxu0 0.0
      %407 = vmatprep.subr.mxu0 0.0
      %408 = vmatpush1.msra.mxu0 0.0
      %409 = vmatprep.subr.mxu0 0.0
      %410 = vmatpush1.msra.mxu0 0.0
      %411 = vmatprep.subr.mxu0 0.0
      %412 = vmatpush1.msra.mxu0 0.0
      %413 = vmatprep.subr.mxu0 0.0
      %414 = vmatpush1.msra.mxu0 0.0
      %415 = vmatprep.subr.mxu0 0.0
      %416 = vmatpush1.msra.mxu0 0.0
      %417 = vmatprep.subr.mxu0 0.0
      %418 = vmatpush1.msra.mxu0 0.0
      %419 = vmatprep.subr.mxu0 0.0
      %420 = vmatpush1.msra.mxu0 0.0
      %421 = vmatprep.subr.mxu0 0.0
      %422 = vmatpush1.msra.mxu0 0.0
      %423 = vmatprep.subr.mxu0 0.0
      %424 = vmatpush1.msra.mxu0 0.0
      %425 = vmatprep.subr.mxu0 0.0
      %426 = vmatpush1.msra.mxu0 0.0
      %427 = vmatprep.subr.mxu0 0.0
      %428 = vmatpush1.msra.mxu0 0.0
      %429 = vmatprep.subr.mxu0 0.0
      %430 = vmatpush1.msra.mxu0 0.0
      %431 = vmatprep.subr.mxu0 0.0
      %432 = vmatpush1.msra.mxu0 0.0
      %433 = vmatprep.subr.mxu0 0.0
      %434 = vmatpush1.msra.mxu0 0.0
      %435 = vmatprep.subr.mxu0 0.0
      %436 = vmatpush1.msra.mxu0 0.0
      %437 = vmatprep.subr.mxu0 0.0
      %438 = vmatpush1.msra.mxu0 0.0
      %439 = vmatprep.subr.mxu0 0.0
      %440 = vmatpush1.msra.mxu0 0.0
      %441 = vmatprep.subr.mxu0 0.0
      %442 = vmatpush1.msra.mxu0 0.0
      %443 = vmatprep.mubr.f32.mxu0 0.0
      %444 = vmatmul.mubr.f32.gmra.mrb[0].mxu0 %v377
      %v445 = vpop.f32.mrb[0].mxu0
      %v446 = vadd.f32 %v373, %v445
      %v447 = vpop.f32.mrb[0].mxu0
      %448 = vdwg.mxu0
      %vm449 = vcmask 15360
      %450 = vst.msk [vmem:[%s263] sm:$0xff] %vm449, %v446
      %p451 = scmp.lt.s32.totalorder %s17, 1
      %s452 = scalar_select %p451, %s17, 1
      %s453 = smul.addr %s452, 8
      %s454 = scalar_lea.vmem %s6, %s453
      // Predicated region
      $region45: #{tpu_custom_call.1} parent=43 // pred_check
        %p455 = pneg %p171
      $region46: #{tpu_custom_call.1} parent=43 // pred_check_branch
        %457 = sbr.rel (%p455) target = $region48
      $region47: #{tpu_custom_call.1} parent=43 // pred_region
        _
      $region48: #{tpu_custom_call.1} parent=43 // pred_fallthru
        _
    $region44: #{tpu_custom_call.1} parent=5 // pred_fallthru
      _
    %p458 = scmp.le.s32.totalorder 2, %s12
    // Predicated region
    $region49: #{tpu_custom_call.1} parent=5 // pred_check
      %p459 = pneg %p458
    $region50: #{tpu_custom_call.1} parent=5 // pred_check_branch
      %461 = sbr.rel (%p459) target = $region52
    $region51: #{tpu_custom_call.1} parent=5 // pred_region
      %s462 = ssub.s32 %s12, 2
      // Predicated region
      $region53: #{tpu_custom_call.1} parent=51 // pred_check
        %p463 = pneg %p177
      $region54: #{tpu_custom_call.1} parent=51 // pred_check_branch
        %465 = sbr.rel (%p463) target = $region56
      $region55: #{tpu_custom_call.1} parent=51 // pred_region
        %p466 = scmp.lt.s32.totalorder %s18, 1
        %s467 = scalar_select %p466, %s18, 1
        %s468 = smul.addr %s467, 8
        %s469 = scalar_lea.vmem %s6, %s468
      $region56: #{tpu_custom_call.1} parent=51 // pred_fallthru
        _
    $region52: #{tpu_custom_call.1} parent=5 // pred_fallthru
      _
  $region6: #{tpu_custom_call.1} parent=0 // loop_footer
    %s16 = sadd.s32 1, %s12
  $region7: #{tpu_custom_call.1} parent=0 // loop_footer_branch
    %11 = sbr.rel target = $region3
  $region8: #{tpu_custom_call.1} parent=0 // loop_exit
    _

</llo_original>
